<compile_context>
chip_gen: v5e
topology: v5e:2x2
jax: 0.10.0
libtpu: 0.0.40
codegen_flags: <defaults>
</compile_context>

<pallas_src>
import jax
import jax.numpy as jnp
from jax import lax
from jax.experimental import pallas as pl
from jax.experimental.pallas import tpu as pltpu

# ----------------------------- configuration --------------------------------
OBS_DIM = 32
HIDDEN_DIM = 32
ACTION_DIM = 4
LOG_STD_BOUNDS = (-5.0, 2.0)

FOLD = 8                       # batch rows folded per kernel row
_MAX_TF = 512                  # folded rows per grid step (= 4096 batch rows)

_IN_F = FOLD * OBS_DIM         # 256 lanes  (folded obs row)
_HID_F = FOLD * HIDDEN_DIM     # 256 lanes  (folded hidden row)
_OUT_F = FOLD * 2 * ACTION_DIM  # 64 lanes  (folded [mu|std] row)

# pre-folded affine constants for the log_std squashing
_C1 = 0.5 * (LOG_STD_BOUNDS[1] - LOG_STD_BOUNDS[0])
_C0 = LOG_STD_BOUNDS[0] + _C1

assert (2 * ACTION_DIM) & (2 * ACTION_DIM - 1) == 0  # lane mask uses & (pow2-1)


def _round_up(n, m):
    return ((n + m - 1) // m) * m


# ------------------------------- kernel --------------------------------------
def _actor_kernel(x_ref, w0_ref, b0_ref, w1_ref, b1_ref, w2_ref, b2_ref, out_ref):
    # x_ref: (tf, FOLD*OBS_DIM) f32.  Cast to bf16 in-kernel (rides VPU slack,
    # avoids a separate wrapper-side HBM cast pass over obs).
    x = x_ref[...].astype(jnp.bfloat16)

    # hidden layer 0 (FOLD-way block-diagonal weights): bf16 MXU, f32 accumulate
    h = jnp.dot(x, w0_ref[...], preferred_element_type=jnp.float32) + b0_ref[...]
    h = jnp.maximum(h, 0.0)

    # hidden layer 1
    h = jnp.dot(h.astype(jnp.bfloat16), w1_ref[...],
                preferred_element_type=jnp.float32) + b1_ref[...]
    h = jnp.maximum(h, 0.0)

    # fused head: per 8-lane group j (= batch row FOLD*r + j),
    # lanes [0:4] are mu and lanes [4:8] are log_std  (== torch.chunk(2, -1)).
    y = jnp.dot(h.astype(jnp.bfloat16), w2_ref[...],
                preferred_element_type=jnp.float32) + b2_ref[...]

    # Epilogue, fully lane-packed: compute std everywhere, then keep mu on the
    # mu lanes via a lane-masked select (no cross-lane slice / concat).
    std = jnp.exp(_C0 + _C1 * jnp.tanh(y))
    lane = lax.broadcasted_iota(jnp.int32, y.shape, 1)
    is_mu = (lane & (2 * ACTION_DIM - 1)) < ACTION_DIM
    out_ref[...] = jnp.where(is_mu, y, std).astype(out_ref.dtype)


# --------------------------- parameter preparation ----------------------------
def prepare_params(params):
    """One-time prep: FOLD-way block-diagonal bf16 weights + tiled f32 biases.

    Call once at init (not per forward) — removes the per-call weight casts.
    """
    w0, b0, w1, b1, w2, b2 = params
    eye = jnp.eye(FOLD, dtype=jnp.float32)
    fold_w = lambda w: jnp.kron(eye, w).astype(jnp.bfloat16)
    fold_b = lambda b: jnp.tile(b.reshape(1, -1), (1, FOLD)).astype(jnp.float32)
    return (fold_w(w0), fold_b(b0), fold_w(w1), fold_b(b1), fold_w(w2), fold_b(b2))


# ------------------------------- wrapper --------------------------------------
def residual_actor_forward(obs, prepared_params, frame_nb=None):
    """Fused trunk MLP + squashed-Gaussian head.  Returns (mu, std)."""
    # TODO(synk): frame_nb only feeds the abstract _forward; the trunk math
    # here does not depend on it.
    del frame_nb
    w0, b0, w1, b1, w2, b2 = prepared_params
    batch = obs.shape[0]

    # Fold FOLD consecutive batch rows per kernel row.  The reshape is a free
    # row-major metadata reshape; padding (<= FOLD-1 rows) only when ragged.
    pad = (-batch) % FOLD
    if pad:
        obs = jnp.pad(obs, ((0, pad), (0, 0)))
    bf = (batch + pad) // FOLD
    obs_f = obs.reshape(bf, _IN_F)

    # Tile selection: one big tile whenever it fits (no forced split on
    # single-TC v5e/v6e); for large batches use an ~even step count so both
    # v7x TensorCores get balanced work.  Partial last block handled by Pallas.
    if bf <= _MAX_TF:
        tf = bf
    else:
        n = pl.cdiv(bf, _MAX_TF)
        n += n % 2
        tf = _round_up(pl.cdiv(bf, n), 8)
    grid = (pl.cdiv(bf, tf),)

    # Weights/biases: whole-array VMEM residents (no blocking / double-buffer).
    resident = pl.BlockSpec(memory_space=pltpu.MemorySpace.VMEM)

    out = pl.pallas_call(
        _actor_kernel,
        grid=grid,
        in_specs=[
            pl.BlockSpec((tf, _IN_F), lambda i: (i, 0)),   # folded obs tile
            resident, resident,                            # w0, b0
            resident, resident,                            # w1, b1
            resident, resident,                            # w2, b2
        ],
        out_specs=pl.BlockSpec((tf, _OUT_F), lambda i: (i, 0)),
        out_shape=jax.ShapeDtypeStruct((bf, _OUT_F), jnp.float32),
        compiler_params=pltpu.CompilerParams(
            dimension_semantics=("parallel",)),
    )(obs_f, w0, b0, w1, b1, w2, b2)

    # Unfold (free row-major reshape), drop padding, split [mu | std].
    y = out.reshape(bf * FOLD, 2 * ACTION_DIM)[:batch]
    return y[:, :ACTION_DIM], y[:, ACTION_DIM:]


# ----------------------------- init & references ------------------------------
def _init_params(key):
    """Deterministic synthetic init (Kaiming-ish). Weights stored (in, out)."""
    ks = jax.random.split(key, 6)
    scale = lambda fan_in: 1.0 / jnp.sqrt(jnp.float32(fan_in))
    w0 = jax.random.normal(ks[0], (OBS_DIM, HIDDEN_DIM), jnp.float32) * scale(OBS_DIM)
    b0 = jax.random.normal(ks[1], (1, HIDDEN_DIM), jnp.float32) * 0.01
    w1 = jax.random.normal(ks[2], (HIDDEN_DIM, HIDDEN_DIM), jnp.float32) * scale(HIDDEN_DIM)
    b1 = jax.random.normal(ks[3], (1, HIDDEN_DIM), jnp.float32) * 0.01
    w2 = jax.random.normal(ks[4], (HIDDEN_DIM, 2 * ACTION_DIM), jnp.float32) * scale(HIDDEN_DIM)
    b2 = jax.random.normal(ks[5], (1, 2 * ACTION_DIM), jnp.float32) * 0.01
    return (w0, b0, w1, b1, w2, b2)


def _head(y):
    mu, log_std = y[:, :ACTION_DIM], y[:, ACTION_DIM:]
    lo, hi = LOG_STD_BOUNDS
    log_std = lo + 0.5 * (hi - lo) * (jnp.tanh(log_std) + 1.0)
    return mu, jnp.exp(log_std)


def _reference_f32(obs, params):
    w0, b0, w1, b1, w2, b2 = params
    h = jnp.maximum(obs @ w0 + b0, 0.0)
    h = jnp.maximum(h @ w1 + b1, 0.0)
    return _head(h @ w2 + b2)


def _reference_bf16(obs, params):
    # mirrors the kernel's mixed precision (bf16 matmul operands, f32 accumulate)
    w0, b0, w1, b1, w2, b2 = params
    bf = jnp.bfloat16
    dot = lambda a, b: jnp.dot(a.astype(bf), b.astype(bf),
                               preferred_element_type=jnp.float32)
    h = jnp.maximum(dot(obs, w0) + b0, 0.0)
    h = jnp.maximum(dot(h, w1) + b1, 0.0)
    return _head(dot(h, w2) + b2)


# --------------------------------- test ---------------------------------------
if __name__ == "__main__":
    key = jax.random.PRNGKey(0)
    k_par, k1, k2, k3 = jax.random.split(key, 4)
    params = _init_params(k_par)
    prepared = prepare_params(params)           # one-time fold + bf16 cast
    fwd = jax.jit(residual_actor_forward)

    # TODO(synk): SquashedNormal distribution object (rsample/log_prob) and the
    # self.outputs logging dict are wrapper-level PyTorch; kernel returns (mu, std).

    # small batch (single tile; pads 8 -> FOLD boundary only)
    obs = jax.random.normal(k1, (8, OBS_DIM), jnp.float32)
    mu, std = fwd(obs, prepared)
    jax.block_until_ready((mu, std))
    assert mu.shape == (8, ACTION_DIM) and std.shape == (8, ACTION_DIM)
    mu_bf, std_bf = _reference_bf16(obs, params)
    assert jnp.allclose(mu, mu_bf, atol=1e-3, rtol=1e-3)
    assert jnp.allclose(std, std_bf, atol=1e-3, rtol=1e-3)
    mu_f, std_f = _reference_f32(obs, params)
    assert jnp.allclose(mu, mu_f, atol=5e-2, rtol=5e-2)
    assert jnp.allclose(std, std_f, atol=5e-2, rtol=5e-2)

    # ragged batch (exercises fold padding)
    obs2 = jax.random.normal(k2, (37, OBS_DIM), jnp.float32)
    mu2, std2 = fwd(obs2, prepared)
    jax.block_until_ready((mu2, std2))
    assert mu2.shape == (37, ACTION_DIM) and std2.shape == (37, ACTION_DIM)
    mu2_bf, std2_bf = _reference_bf16(obs2, params)
    assert jnp.allclose(mu2, mu2_bf, atol=1e-3, rtol=1e-3)
    assert jnp.allclose(std2, std2_bf, atol=1e-3, rtol=1e-3)

    # large batch (multi-step parallel grid + partial last block)
    obs3 = jax.random.normal(k3, (9000, OBS_DIM), jnp.float32)
    mu3, std3 = fwd(obs3, prepared)
    jax.block_until_ready((mu3, std3))
    assert mu3.shape == (9000, ACTION_DIM) and std3.shape == (9000, ACTION_DIM)
    mu3_bf, std3_bf = _reference_bf16(obs3, params)
    assert jnp.allclose(mu3, mu3_bf, atol=1e-3, rtol=1e-3)
    assert jnp.allclose(std3, std3_bf, atol=1e-3, rtol=1e-3)

    print("KERNEL_OK")
</pallas_src>

<mosaic_0001>
module attributes {stable_mosaic.version = 11 : i64} {
  func.func @_actor_kernel(%arg0: i32, %arg1: memref<1x256xf32, #tpu.memory_space<vmem>>, %arg2: memref<256x256xbf16, #tpu.memory_space<vmem>>, %arg3: memref<1x256xf32, #tpu.memory_space<vmem>>, %arg4: memref<256x256xbf16, #tpu.memory_space<vmem>>, %arg5: memref<1x256xf32, #tpu.memory_space<vmem>>, %arg6: memref<256x64xbf16, #tpu.memory_space<vmem>>, %arg7: memref<1x64xf32, #tpu.memory_space<vmem>>, %arg8: memref<1x64xf32, #tpu.memory_space<vmem>>) attributes {dimension_semantics = [#tpu.dimension_semantics<parallel>], iteration_bounds = array<i64: 1>, scalar_prefetch = 0 : i64, scratch_operands = 0 : i64, tpu.core_type = #tpu.core_type<tc>, window_params = [{transform_indices = @transform_0, window_bounds = array<i64: 1, 256>}, {pipeline_mode = #tpu.pipeline_mode<synchronous>, transform_indices = @transform_1, window_bounds = array<i64: 256, 256>}, {pipeline_mode = #tpu.pipeline_mode<synchronous>, transform_indices = @transform_2, window_bounds = array<i64: 1, 256>}, {pipeline_mode = #tpu.pipeline_mode<synchronous>, transform_indices = @transform_3, window_bounds = array<i64: 256, 256>}, {pipeline_mode = #tpu.pipeline_mode<synchronous>, transform_indices = @transform_4, window_bounds = array<i64: 1, 256>}, {pipeline_mode = #tpu.pipeline_mode<synchronous>, transform_indices = @transform_5, window_bounds = array<i64: 256, 64>}, {pipeline_mode = #tpu.pipeline_mode<synchronous>, transform_indices = @transform_6, window_bounds = array<i64: 1, 64>}, {transform_indices = @transform_7, window_bounds = array<i64: 1, 64>}]} {
    %c0 = arith.constant 0 : index
    %c0_0 = arith.constant 0 : index
    %0 = vector.load %arg1[%c0, %c0_0] : memref<1x256xf32, #tpu.memory_space<vmem>>, vector<1x256xf32>
    %1 = arith.truncf %0 : vector<1x256xf32> to vector<1x256xbf16>
    %c0_1 = arith.constant 0 : index
    %c0_2 = arith.constant 0 : index
    %2 = vector.load %arg2[%c0_1, %c0_2] : memref<256x256xbf16, #tpu.memory_space<vmem>>, vector<256x256xbf16>
    %cst = arith.constant dense<0.000000e+00> : vector<1x256xf32>
    %3 = tpu.matmul %1, %2, %cst {dimension_numbers = #tpu.dot_dimension_numbers<[1], [0], [0], [1], [0, 0, 1, 1], [], []>} : vector<1x256xbf16>, vector<256x256xbf16>, vector<1x256xf32> -> vector<1x256xf32>
    %c0_3 = arith.constant 0 : index
    %c0_4 = arith.constant 0 : index
    %4 = vector.load %arg3[%c0_3, %c0_4] : memref<1x256xf32, #tpu.memory_space<vmem>>, vector<1x256xf32>
    %5 = arith.addf %3, %4 : vector<1x256xf32>
    %cst_5 = arith.constant 0.000000e+00 : f32
    %6 = vector.broadcast %cst_5 : f32 to vector<1x256xf32>
    %7 = arith.maximumf %5, %6 : vector<1x256xf32>
    %8 = arith.truncf %7 : vector<1x256xf32> to vector<1x256xbf16>
    %c0_6 = arith.constant 0 : index
    %c0_7 = arith.constant 0 : index
    %9 = vector.load %arg4[%c0_6, %c0_7] : memref<256x256xbf16, #tpu.memory_space<vmem>>, vector<256x256xbf16>
    %cst_8 = arith.constant dense<0.000000e+00> : vector<1x256xf32>
    %10 = tpu.matmul %8, %9, %cst_8 {dimension_numbers = #tpu.dot_dimension_numbers<[1], [0], [0], [1], [0, 0, 1, 1], [], []>} : vector<1x256xbf16>, vector<256x256xbf16>, vector<1x256xf32> -> vector<1x256xf32>
    %c0_9 = arith.constant 0 : index
    %c0_10 = arith.constant 0 : index
    %11 = vector.load %arg5[%c0_9, %c0_10] : memref<1x256xf32, #tpu.memory_space<vmem>>, vector<1x256xf32>
    %12 = arith.addf %10, %11 : vector<1x256xf32>
    %cst_11 = arith.constant 0.000000e+00 : f32
    %13 = vector.broadcast %cst_11 : f32 to vector<1x256xf32>
    %14 = arith.maximumf %12, %13 : vector<1x256xf32>
    %15 = arith.truncf %14 : vector<1x256xf32> to vector<1x256xbf16>
    %c0_12 = arith.constant 0 : index
    %c0_13 = arith.constant 0 : index
    %16 = vector.load %arg6[%c0_12, %c0_13] : memref<256x64xbf16, #tpu.memory_space<vmem>>, vector<256x64xbf16>
    %cst_14 = arith.constant dense<0.000000e+00> : vector<1x64xf32>
    %17 = tpu.matmul %15, %16, %cst_14 {dimension_numbers = #tpu.dot_dimension_numbers<[1], [0], [0], [1], [0, 0, 1, 1], [], []>} : vector<1x256xbf16>, vector<256x64xbf16>, vector<1x64xf32> -> vector<1x64xf32>
    %c0_15 = arith.constant 0 : index
    %c0_16 = arith.constant 0 : index
    %18 = vector.load %arg7[%c0_15, %c0_16] : memref<1x64xf32, #tpu.memory_space<vmem>>, vector<1x64xf32>
    %19 = arith.addf %17, %18 : vector<1x64xf32>
    %20 = math.tanh %19 : vector<1x64xf32>
    %cst_17 = arith.constant 3.500000e+00 : f32
    %21 = vector.broadcast %cst_17 : f32 to vector<1x64xf32>
    %22 = arith.mulf %21, %20 : vector<1x64xf32>
    %cst_18 = arith.constant -1.500000e+00 : f32
    %23 = vector.broadcast %cst_18 : f32 to vector<1x64xf32>
    %24 = arith.addf %23, %22 : vector<1x64xf32>
    %25 = math.exp %24 : vector<1x64xf32>
    %26 = tpu.iota {dimensions = array<i32: 1>} : vector<1x64xi32>
    %c7_i32 = arith.constant 7 : i32
    %27 = vector.broadcast %c7_i32 : i32 to vector<1x64xi32>
    %28 = arith.andi %26, %27 : vector<1x64xi32>
    %c4_i32 = arith.constant 4 : i32
    %29 = vector.broadcast %c4_i32 : i32 to vector<1x64xi32>
    %30 = arith.cmpi slt, %28, %29 : vector<1x64xi32>
    %31 = arith.select %30, %19, %25 : vector<1x64xi1>, vector<1x64xf32>
    %c0_19 = arith.constant 0 : index
    %c0_20 = arith.constant 0 : index
    %32 = vector.load %arg8[%c0_19, %c0_20] : memref<1x64xf32, #tpu.memory_space<vmem>>, vector<1x64xf32>
    tpu.vector_store %arg8[%c0_19, %c0_20], %31 {strides = array<i32>} : memref<1x64xf32, #tpu.memory_space<vmem>>, vector<1x64xf32>,
    return
  }
  func.func @transform_0(%arg0: i32) -> (i32, i32) {
    %c0_i32 = arith.constant 0 : i32
    %c0_i32_0 = arith.constant 0 : i32
    return %arg0, %c0_i32 : i32, i32
  }
  func.func @transform_1(%arg0: i32) -> (i32, i32) {
    %c0_i32 = arith.constant 0 : i32
    %c0_i32_0 = arith.constant 0 : i32
    %c0_i32_1 = arith.constant 0 : i32
    return %c0_i32, %c0_i32_0 : i32, i32
  }
  func.func @transform_2(%arg0: i32) -> (i32, i32) {
    %c0_i32 = arith.constant 0 : i32
    %c0_i32_0 = arith.constant 0 : i32
    %c0_i32_1 = arith.constant 0 : i32
    return %c0_i32, %c0_i32_0 : i32, i32
  }
  func.func @transform_3(%arg0: i32) -> (i32, i32) {
    %c0_i32 = arith.constant 0 : i32
    %c0_i32_0 = arith.constant 0 : i32
    %c0_i32_1 = arith.constant 0 : i32
    return %c0_i32, %c0_i32_0 : i32, i32
  }
  func.func @transform_4(%arg0: i32) -> (i32, i32) {
    %c0_i32 = arith.constant 0 : i32
    %c0_i32_0 = arith.constant 0 : i32
    %c0_i32_1 = arith.constant 0 : i32
    return %c0_i32, %c0_i32_0 : i32, i32
  }
  func.func @transform_5(%arg0: i32) -> (i32, i32) {
    %c0_i32 = arith.constant 0 : i32
    %c0_i32_0 = arith.constant 0 : i32
    %c0_i32_1 = arith.constant 0 : i32
    return %c0_i32, %c0_i32_0 : i32, i32
  }
  func.func @transform_6(%arg0: i32) -> (i32, i32) {
    %c0_i32 = arith.constant 0 : i32
    %c0_i32_0 = arith.constant 0 : i32
    %c0_i32_1 = arith.constant 0 : i32
    return %c0_i32, %c0_i32_0 : i32, i32
  }
  func.func @transform_7(%arg0: i32) -> (i32, i32) {
    %c0_i32 = arith.constant 0 : i32
    %c0_i32_0 = arith.constant 0 : i32
    return %arg0, %c0_i32 : i32, i32
  }
}

</mosaic_0001>

<llo_original>
// kernel: residual_actor_forward.1
$region0: #{residual_actor_forward.1}
  #allocation0 [shape = 'u32[]', space=smem, size = 0x4, offset = 0x4, fixed_abs, tag = 'smem constant byte address 0x4 - core index']
  #allocation1 [shape = 'u32[72,128]{1,0:T(1,128)}', space=vmem, size = 0x9000, scoped, tag = 'internal scratch']
  %s0 = inlined_call_operand.vmem [shape: f32[1,256], index: 0, kind: input, shape index: {}]
  %s1 = inlined_call_operand.hbm [shape: bf16[256,256], index: 1, kind: input, shape index: {}]
  %s2 = inlined_call_operand.vmem [shape: f32[1,256], index: 2, kind: input, shape index: {}]
  %s3 = inlined_call_operand.hbm [shape: bf16[256,256], index: 3, kind: input, shape index: {}]
  %s4 = inlined_call_operand.vmem [shape: f32[1,256], index: 4, kind: input, shape index: {}]
  %s5 = inlined_call_operand.vmem [shape: bf16[256,64], index: 5, kind: input, shape index: {}]
  %s6 = inlined_call_operand.vmem [shape: f32[1,64], index: 6, kind: input, shape index: {}]
  %s7 = inlined_call_operand.vmem [shape: f32[1,64], index: 7, kind: output, shape index: {}]
  %s8 = sld [smem:[#allocation0]]
  $region46: #{residual_actor_forward.1} parent=0
    _
  %s10 = ssub.s32 1, %s8
  %s11 = scalar_select 0, %s10, %s8
  $region1: #{residual_actor_forward.1} parent=0
    #allocation2 [shape = 'u8[131072]{0}', space=vmem, size = 0x20000, scoped, tag = 'input window, operand 1, single buffered']
    #allocation3 [shape = 's32[1]{0}', space=sflag, size = 0x4, scoped, tag = 'scoped memory for residual_actor_forward.1']
    #allocation4 [shape = 'u8[131072]{0}', space=vmem, size = 0x20000, scoped, tag = 'input window, operand 3, single buffered']
    #allocation5 [shape = 's32[1]{0}', space=sflag, size = 0x4, scoped, tag = 'scoped memory for residual_actor_forward.1']
    %12 = vsyncpa [#allocation3], 0
    %13 = vsyncpa [#allocation5], 0
    // Predicated region
    $region2: #{residual_actor_forward.1} parent=1 // pred_check
      _
    $region3: #{residual_actor_forward.1} parent=1 // pred_check_branch
      %15 = sbr.rel (0) target = $region5
    $region4: #{residual_actor_forward.1} parent=1 // pred_region
      _
    $region5: #{residual_actor_forward.1} parent=1 // pred_fallthru
      _
    // Predicated region
    $region6: #{residual_actor_forward.1} parent=1 // pred_check
      _
    $region7: #{residual_actor_forward.1} parent=1 // pred_check_branch
      %17 = sbr.rel (0) target = $region9
    $region8: #{residual_actor_forward.1} parent=1 // pred_region
      %19 = vsyncadd [#allocation3], 0
      %s20 = sshll.u32 %s1, 4
      %s21 = int_to_ptr.hbm [resolvable:$true] %s20
      %s22 = sshll.u32 [#allocation2], 4
      %s23 = int_to_ptr.vmem [resolvable:$true] %s22
      %28 = dma.hbm_to_vmem [thread:$0]  %s21, 4096, %s23, [#allocation3], 128, 128, 8
    $region9: #{residual_actor_forward.1} parent=1 // pred_fallthru
      _
    // Predicated region
    $region10: #{residual_actor_forward.1} parent=1 // pred_check
      _
    $region11: #{residual_actor_forward.1} parent=1 // pred_check_branch
      %30 = sbr.rel (0) target = $region13
    $region12: #{residual_actor_forward.1} parent=1 // pred_region
      _
    $region13: #{residual_actor_forward.1} parent=1 // pred_fallthru
      _
    // Predicated region
    $region14: #{residual_actor_forward.1} parent=1 // pred_check
      _
    $region15: #{residual_actor_forward.1} parent=1 // pred_check_branch
      %32 = sbr.rel (0) target = $region17
    $region16: #{residual_actor_forward.1} parent=1 // pred_region
      %34 = vsyncadd [#allocation5], 0
      %s35 = sshll.u32 %s3, 4
      %s36 = int_to_ptr.hbm [resolvable:$true] %s35
      %s37 = sshll.u32 [#allocation4], 4
      %s38 = int_to_ptr.vmem [resolvable:$true] %s37
      %43 = dma.hbm_to_vmem [thread:$0]  %s36, 4096, %s38, [#allocation5], 128, 128, 8
    $region17: #{residual_actor_forward.1} parent=1 // pred_fallthru
      _
    // Predicated region
    $region18: #{residual_actor_forward.1} parent=1 // pred_check
      _
    $region19: #{residual_actor_forward.1} parent=1 // pred_check_branch
      %45 = sbr.rel (0) target = $region21
    $region20: #{residual_actor_forward.1} parent=1 // pred_region
      _
    $region21: #{residual_actor_forward.1} parent=1 // pred_fallthru
      _
    // Predicated region
    $region22: #{residual_actor_forward.1} parent=1 // pred_check
      _
    $region23: #{residual_actor_forward.1} parent=1 // pred_check_branch
      %47 = sbr.rel (0) target = $region25
    $region24: #{residual_actor_forward.1} parent=1 // pred_region
      _
    $region25: #{residual_actor_forward.1} parent=1 // pred_fallthru
      _
    // Predicated region
    $region26: #{residual_actor_forward.1} parent=1 // pred_check
      _
    $region27: #{residual_actor_forward.1} parent=1 // pred_check_branch
      %49 = sbr.rel (0) target = $region29
    $region28: #{residual_actor_forward.1} parent=1 // pred_region
      _
    $region29: #{residual_actor_forward.1} parent=1 // pred_fallthru
      _
    // Predicated region
    $region30: #{residual_actor_forward.1} parent=1 // pred_check
      _
    $region31: #{residual_actor_forward.1} parent=1 // pred_check_branch
      %51 = sbr.rel (0) target = $region33
    $region32: #{residual_actor_forward.1} parent=1 // pred_region
      %53 = dma.done [#allocation3], 4096
    $region33: #{residual_actor_forward.1} parent=1 // pred_fallthru
      _
    // Predicated region
    $region34: #{residual_actor_forward.1} parent=1 // pred_check
      _
    $region35: #{residual_actor_forward.1} parent=1 // pred_check_branch
      %55 = sbr.rel (0) target = $region37
    $region36: #{residual_actor_forward.1} parent=1 // pred_region
      %57 = dma.done [#allocation5], 4096
    $region37: #{residual_actor_forward.1} parent=1 // pred_fallthru
      _
    %v58 = vld [vmem:[%s0] sm:$0x3]
    %v60 = vperm.slane %v58, 0
    %v61 = vperm.slane %v58, 1
    %v64 = vpack.c.bf16 %v60, %v60
    %v65 = vpack.c.bf16 %v61, %v61
    %v66 = vld [vmem:[#allocation2] sm:$0xff]
    %v67 = vld [vmem:[#allocation2 + $0x8] sm:$0xff]
    %v68 = vld [vmem:[#allocation2 + $0x10] sm:$0xff]
    %v69 = vld [vmem:[#allocation2 + $0x18] sm:$0xff]
    %v70 = vld [vmem:[#allocation2 + $0x20] sm:$0xff]
    %v71 = vld [vmem:[#allocation2 + $0x28] sm:$0xff]
    %v72 = vld [vmem:[#allocation2 + $0x30] sm:$0xff]
    %v73 = vld [vmem:[#allocation2 + $0x38] sm:$0xff]
    %v74 = vld [vmem:[#allocation2 + $0x40] sm:$0xff]
    %v75 = vld [vmem:[#allocation2 + $0x48] sm:$0xff]
    %v76 = vld [vmem:[#allocation2 + $0x50] sm:$0xff]
    %v77 = vld [vmem:[#allocation2 + $0x58] sm:$0xff]
    %v78 = vld [vmem:[#allocation2 + $0x60] sm:$0xff]
    %v79 = vld [vmem:[#allocation2 + $0x68] sm:$0xff]
    %v80 = vld [vmem:[#allocation2 + $0x70] sm:$0xff]
    %v81 = vld [vmem:[#allocation2 + $0x78] sm:$0xff]
    %v82 = vld [vmem:[#allocation2 + $0x80] sm:$0xff]
    %v83 = vld [vmem:[#allocation2 + $0x88] sm:$0xff]
    %v84 = vld [vmem:[#allocation2 + $0x90] sm:$0xff]
    %v85 = vld [vmem:[#allocation2 + $0x98] sm:$0xff]
    %v86 = vld [vmem:[#allocation2 + $0xa0] sm:$0xff]
    %v87 = vld [vmem:[#allocation2 + $0xa8] sm:$0xff]
    %v88 = vld [vmem:[#allocation2 + $0xb0] sm:$0xff]
    %v89 = vld [vmem:[#allocation2 + $0xb8] sm:$0xff]
    %v90 = vld [vmem:[#allocation2 + $0xc0] sm:$0xff]
    %v91 = vld [vmem:[#allocation2 + $0xc8] sm:$0xff]
    %v92 = vld [vmem:[#allocation2 + $0xd0] sm:$0xff]
    %v93 = vld [vmem:[#allocation2 + $0xd8] sm:$0xff]
    %v94 = vld [vmem:[#allocation2 + $0xe0] sm:$0xff]
    %v95 = vld [vmem:[#allocation2 + $0xe8] sm:$0xff]
    %v96 = vld [vmem:[#allocation2 + $0xf0] sm:$0xff]
    %v97 = vld [vmem:[#allocation2 + $0xf8] sm:$0xff]
    %v98 = vld [vmem:[%s2] sm:$0x3]
    %v131 = vunpack.c.l.b16 %v66
    %v132 = vunpack.c.h.b16 %v66
    %v133 = vunpack.c.l.b16 %v67
    %v134 = vunpack.c.h.b16 %v67
    %v135 = vunpack.c.l.b16 %v68
    %v136 = vunpack.c.h.b16 %v68
    %v137 = vunpack.c.l.b16 %v69
    %v138 = vunpack.c.h.b16 %v69
    %v139 = vunpack.c.l.b16 %v70
    %v140 = vunpack.c.h.b16 %v70
    %v141 = vunpack.c.l.b16 %v71
    %v142 = vunpack.c.h.b16 %v71
    %v143 = vunpack.c.l.b16 %v72
    %v144 = vunpack.c.h.b16 %v72
    %v145 = vunpack.c.l.b16 %v73
    %v146 = vunpack.c.h.b16 %v73
    %v147 = vunpack.c.l.b16 %v74
    %v148 = vunpack.c.h.b16 %v74
    %v149 = vunpack.c.l.b16 %v75
    %v150 = vunpack.c.h.b16 %v75
    %v151 = vunpack.c.l.b16 %v76
    %v152 = vunpack.c.h.b16 %v76
    %v153 = vunpack.c.l.b16 %v77
    %v154 = vunpack.c.h.b16 %v77
    %v155 = vunpack.c.l.b16 %v78
    %v156 = vunpack.c.h.b16 %v78
    %v157 = vunpack.c.l.b16 %v79
    %v158 = vunpack.c.h.b16 %v79
    %v159 = vunpack.c.l.b16 %v80
    %v160 = vunpack.c.h.b16 %v80
    %v161 = vunpack.c.l.b16 %v81
    %v162 = vunpack.c.h.b16 %v81
    %v163 = vunpack.c.l.b16 %v82
    %v164 = vunpack.c.h.b16 %v82
    %v165 = vunpack.c.l.b16 %v83
    %v166 = vunpack.c.h.b16 %v83
    %v167 = vunpack.c.l.b16 %v84
    %v168 = vunpack.c.h.b16 %v84
    %v169 = vunpack.c.l.b16 %v85
    %v170 = vunpack.c.h.b16 %v85
    %v171 = vunpack.c.l.b16 %v86
    %v172 = vunpack.c.h.b16 %v86
    %v173 = vunpack.c.l.b16 %v87
    %v174 = vunpack.c.h.b16 %v87
    %v175 = vunpack.c.l.b16 %v88
    %v176 = vunpack.c.h.b16 %v88
    %v177 = vunpack.c.l.b16 %v89
    %v178 = vunpack.c.h.b16 %v89
    %v179 = vunpack.c.l.b16 %v90
    %v180 = vunpack.c.h.b16 %v90
    %v181 = vunpack.c.l.b16 %v91
    %v182 = vunpack.c.h.b16 %v91
    %v183 = vunpack.c.l.b16 %v92
    %v184 = vunpack.c.h.b16 %v92
    %v185 = vunpack.c.l.b16 %v93
    %v186 = vunpack.c.h.b16 %v93
    %v187 = vunpack.c.l.b16 %v94
    %v188 = vunpack.c.h.b16 %v94
    %v189 = vunpack.c.l.b16 %v95
    %v190 = vunpack.c.h.b16 %v95
    %v191 = vunpack.c.l.b16 %v96
    %v192 = vunpack.c.h.b16 %v96
    %v193 = vunpack.c.l.b16 %v97
    %v194 = vunpack.c.h.b16 %v97
    %v195 = vpack.c.b16 %v133, %v131
    %v196 = vpack.c.b16 %v134, %v132
    %v197 = vpack.c.b16 %v137, %v135
    %v198 = vpack.c.b16 %v138, %v136
    %v199 = vpack.c.b16 %v141, %v139
    %v200 = vpack.c.b16 %v142, %v140
    %v201 = vpack.c.b16 %v145, %v143
    %v202 = vpack.c.b16 %v146, %v144
    %v203 = vpack.c.b16 %v149, %v147
    %v204 = vpack.c.b16 %v150, %v148
    %v205 = vpack.c.b16 %v153, %v151
    %v206 = vpack.c.b16 %v154, %v152
    %v207 = vpack.c.b16 %v157, %v155
    %v208 = vpack.c.b16 %v158, %v156
    %v209 = vpack.c.b16 %v161, %v159
    %v210 = vpack.c.b16 %v162, %v160
    %v211 = vpack.c.b16 %v165, %v163
    %v212 = vpack.c.b16 %v166, %v164
    %v213 = vpack.c.b16 %v169, %v167
    %v214 = vpack.c.b16 %v170, %v168
    %v215 = vpack.c.b16 %v173, %v171
    %v216 = vpack.c.b16 %v174, %v172
    %v217 = vpack.c.b16 %v177, %v175
    %v218 = vpack.c.b16 %v178, %v176
    %v219 = vpack.c.b16 %v181, %v179
    %v220 = vpack.c.b16 %v182, %v180
    %v221 = vpack.c.b16 %v185, %v183
    %v222 = vpack.c.b16 %v186, %v184
    %v223 = vpack.c.b16 %v189, %v187
    %v224 = vpack.c.b16 %v190, %v188
    %v225 = vpack.c.b16 %v193, %v191
    %v226 = vpack.c.b16 %v194, %v192
    %v260 = vperm.slane %v98, 0
    %v261 = vperm.slane %v98, 1
    %264 = vmatpush.bf16.msra.mxu0 %v209
    %265 = vmatpush.bf16.msra.mxu0 %v207
    %266 = vmatpush.bf16.msra.mxu0 %v205
    %267 = vmatpush.bf16.msra.mxu0 %v203
    %268 = vmatpush.bf16.msra.mxu0 %v201
    %269 = vmatpush.bf16.msra.mxu0 %v199
    %270 = vmatpush.bf16.msra.mxu0 %v197
    %271 = vmatpush.bf16.msra.mxu0 %v195
    %272 = vmatmul.bf16.gmra.mxu0 %v64
    %v273 = vpop.f32.mrf.mxu0
    %v274 = vadd.f32 %v260, %v273
    %v275 = vpop.f32.mrf.mxu0
    %276 = vdwg.mxu0
    %277 = vmatpush.bf16.msra.mxu0 %v225
    %278 = vmatpush.bf16.msra.mxu0 %v223
    %279 = vmatpush.bf16.msra.mxu0 %v221
    %280 = vmatpush.bf16.msra.mxu0 %v219
    %281 = vmatpush.bf16.msra.mxu0 %v217
    %282 = vmatpush.bf16.msra.mxu0 %v215
    %283 = vmatpush.bf16.msra.mxu0 %v213
    %284 = vmatpush.bf16.msra.mxu0 %v211
    %285 = vmatmul.bf16.gmra.mxu0 %v65
    %v286 = vpop.f32.mrf.mxu0
    %v287 = vadd.f32 %v274, %v286
    %v288 = vpop.f32.mrf.mxu0
    %289 = vdwg.mxu0
    %290 = vmatpush.bf16.msra.mxu0 %v210
    %291 = vmatpush.bf16.msra.mxu0 %v208
    %292 = vmatpush.bf16.msra.mxu0 %v206
    %293 = vmatpush.bf16.msra.mxu0 %v204
    %294 = vmatpush.bf16.msra.mxu0 %v202
    %295 = vmatpush.bf16.msra.mxu0 %v200
    %296 = vmatpush.bf16.msra.mxu0 %v198
    %297 = vmatpush.bf16.msra.mxu0 %v196
    %298 = vmatmul.bf16.gmra.mxu0 %v64
    %v299 = vpop.f32.mrf.mxu0
    %v300 = vadd.f32 %v261, %v299
    %v301 = vpop.f32.mrf.mxu0
    %302 = vdwg.mxu0
    %303 = vmatpush.bf16.msra.mxu0 %v226
    %304 = vmatpush.bf16.msra.mxu0 %v224
    %305 = vmatpush.bf16.msra.mxu0 %v222
    %306 = vmatpush.bf16.msra.mxu0 %v220
    %307 = vmatpush.bf16.msra.mxu0 %v218
    %308 = vmatpush.bf16.msra.mxu0 %v216
    %309 = vmatpush.bf16.msra.mxu0 %v214
    %310 = vmatpush.bf16.msra.mxu0 %v212
    %311 = vmatmul.bf16.gmra.mxu0 %v65
    %v312 = vpop.f32.mrf.mxu0
    %v313 = vadd.f32 %v300, %v312
    %v314 = vpop.f32.mrf.mxu0
    %315 = vdwg.mxu0
    %v316 = vmax.f32 %v287, 0.0
    %v317 = vmax.f32 %v313, 0.0
    %v318 = vpack.c.bf16 %v316, %v316
    %v319 = vpack.c.bf16 %v317, %v317
    %v320 = vld [vmem:[#allocation4] sm:$0xff]
    %v321 = vld [vmem:[#allocation4 + $0x8] sm:$0xff]
    %v322 = vld [vmem:[#allocation4 + $0x10] sm:$0xff]
    %v323 = vld [vmem:[#allocation4 + $0x18] sm:$0xff]
    %v324 = vld [vmem:[#allocation4 + $0x20] sm:$0xff]
    %v325 = vld [vmem:[#allocation4 + $0x28] sm:$0xff]
    %v326 = vld [vmem:[#allocation4 + $0x30] sm:$0xff]
    %v327 = vld [vmem:[#allocation4 + $0x38] sm:$0xff]
    %v328 = vld [vmem:[#allocation4 + $0x40] sm:$0xff]
    %v329 = vld [vmem:[#allocation4 + $0x48] sm:$0xff]
    %v330 = vld [vmem:[#allocation4 + $0x50] sm:$0xff]
    %v331 = vld [vmem:[#allocation4 + $0x58] sm:$0xff]
    %v332 = vld [vmem:[#allocation4 + $0x60] sm:$0xff]
    %v333 = vld [vmem:[#allocation4 + $0x68] sm:$0xff]
    %v334 = vld [vmem:[#allocation4 + $0x70] sm:$0xff]
    %v335 = vld [vmem:[#allocation4 + $0x78] sm:$0xff]
    %v336 = vld [vmem:[#allocation4 + $0x80] sm:$0xff]
    %v337 = vld [vmem:[#allocation4 + $0x88] sm:$0xff]
    %v338 = vld [vmem:[#allocation4 + $0x90] sm:$0xff]
    %v339 = vld [vmem:[#allocation4 + $0x98] sm:$0xff]
    %v340 = vld [vmem:[#allocation4 + $0xa0] sm:$0xff]
    %v341 = vld [vmem:[#allocation4 + $0xa8] sm:$0xff]
    %v342 = vld [vmem:[#allocation4 + $0xb0] sm:$0xff]
    %v343 = vld [vmem:[#allocation4 + $0xb8] sm:$0xff]
    %v344 = vld [vmem:[#allocation4 + $0xc0] sm:$0xff]
    %v345 = vld [vmem:[#allocation4 + $0xc8] sm:$0xff]
    %v346 = vld [vmem:[#allocation4 + $0xd0] sm:$0xff]
    %v347 = vld [vmem:[#allocation4 + $0xd8] sm:$0xff]
    %v348 = vld [vmem:[#allocation4 + $0xe0] sm:$0xff]
    %v349 = vld [vmem:[#allocation4 + $0xe8] sm:$0xff]
    %v350 = vld [vmem:[#allocation4 + $0xf0] sm:$0xff]
    %v351 = vld [vmem:[#allocation4 + $0xf8] sm:$0xff]
    %v352 = vld [vmem:[%s4] sm:$0x3]
    %v385 = vunpack.c.l.b16 %v320
    %v386 = vunpack.c.h.b16 %v320
    %v387 = vunpack.c.l.b16 %v321
    %v388 = vunpack.c.h.b16 %v321
    %v389 = vunpack.c.l.b16 %v322
    %v390 = vunpack.c.h.b16 %v322
    %v391 = vunpack.c.l.b16 %v323
    %v392 = vunpack.c.h.b16 %v323
    %v393 = vunpack.c.l.b16 %v324
    %v394 = vunpack.c.h.b16 %v324
    %v395 = vunpack.c.l.b16 %v325
    %v396 = vunpack.c.h.b16 %v325
    %v397 = vunpack.c.l.b16 %v326
    %v398 = vunpack.c.h.b16 %v326
    %v399 = vunpack.c.l.b16 %v327
    %v400 = vunpack.c.h.b16 %v327
    %v401 = vunpack.c.l.b16 %v328
    %v402 = vunpack.c.h.b16 %v328
    %v403 = vunpack.c.l.b16 %v329
    %v404 = vunpack.c.h.b16 %v329
    %v405 = vunpack.c.l.b16 %v330
    %v406 = vunpack.c.h.b16 %v330
    %v407 = vunpack.c.l.b16 %v331
    %v408 = vunpack.c.h.b16 %v331
    %v409 = vunpack.c.l.b16 %v332
    %v410 = vunpack.c.h.b16 %v332
    %v411 = vunpack.c.l.b16 %v333
    %v412 = vunpack.c.h.b16 %v333
    %v413 = vunpack.c.l.b16 %v334
    %v414 = vunpack.c.h.b16 %v334
    %v415 = vunpack.c.l.b16 %v335
    %v416 = vunpack.c.h.b16 %v335
    %v417 = vunpack.c.l.b16 %v336
    %v418 = vunpack.c.h.b16 %v336
    %v419 = vunpack.c.l.b16 %v337
    %v420 = vunpack.c.h.b16 %v337
    %v421 = vunpack.c.l.b16 %v338
    %v422 = vunpack.c.h.b16 %v338
    %v423 = vunpack.c.l.b16 %v339
    %v424 = vunpack.c.h.b16 %v339
    %v425 = vunpack.c.l.b16 %v340
    %v426 = vunpack.c.h.b16 %v340
    %v427 = vunpack.c.l.b16 %v341
    %v428 = vunpack.c.h.b16 %v341
    %v429 = vunpack.c.l.b16 %v342
    %v430 = vunpack.c.h.b16 %v342
    %v431 = vunpack.c.l.b16 %v343
    %v432 = vunpack.c.h.b16 %v343
    %v433 = vunpack.c.l.b16 %v344
    %v434 = vunpack.c.h.b16 %v344
    %v435 = vunpack.c.l.b16 %v345
    %v436 = vunpack.c.h.b16 %v345
    %v437 = vunpack.c.l.b16 %v346
    %v438 = vunpack.c.h.b16 %v346
    %v439 = vunpack.c.l.b16 %v347
    %v440 = vunpack.c.h.b16 %v347
    %v441 = vunpack.c.l.b16 %v348
    %v442 = vunpack.c.h.b16 %v348
    %v443 = vunpack.c.l.b16 %v349
    %v444 = vunpack.c.h.b16 %v349
    %v445 = vunpack.c.l.b16 %v350
    %v446 = vunpack.c.h.b16 %v350
    %v447 = vunpack.c.l.b16 %v351
    %v448 = vunpack.c.h.b16 %v351
    %v449 = vpack.c.b16 %v387, %v385
    %v450 = vpack.c.b16 %v388, %v386
    %v451 = vpack.c.b16 %v391, %v389
    %v452 = vpack.c.b16 %v392, %v390
    %v453 = vpack.c.b16 %v395, %v393
    %v454 = vpack.c.b16 %v396, %v394
    %v455 = vpack.c.b16 %v399, %v397
    %v456 = vpack.c.b16 %v400, %v398
    %v457 = vpack.c.b16 %v403, %v401
    %v458 = vpack.c.b16 %v404, %v402
    %v459 = vpack.c.b16 %v407, %v405
    %v460 = vpack.c.b16 %v408, %v406
    %v461 = vpack.c.b16 %v411, %v409
    %v462 = vpack.c.b16 %v412, %v410
    %v463 = vpack.c.b16 %v415, %v413
    %v464 = vpack.c.b16 %v416, %v414
    %v465 = vpack.c.b16 %v419, %v417
    %v466 = vpack.c.b16 %v420, %v418
    %v467 = vpack.c.b16 %v423, %v421
    %v468 = vpack.c.b16 %v424, %v422
    %v469 = vpack.c.b16 %v427, %v425
    %v470 = vpack.c.b16 %v428, %v426
    %v471 = vpack.c.b16 %v431, %v429
    %v472 = vpack.c.b16 %v432, %v430
    %v473 = vpack.c.b16 %v435, %v433
    %v474 = vpack.c.b16 %v436, %v434
    %v475 = vpack.c.b16 %v439, %v437
    %v476 = vpack.c.b16 %v440, %v438
    %v477 = vpack.c.b16 %v443, %v441
    %v478 = vpack.c.b16 %v444, %v442
    %v479 = vpack.c.b16 %v447, %v445
    %v480 = vpack.c.b16 %v448, %v446
    %v514 = vperm.slane %v352, 0
    %v515 = vperm.slane %v352, 1
    %518 = vmatpush.bf16.msra.mxu0 %v463
    %519 = vmatpush.bf16.msra.mxu0 %v461
    %520 = vmatpush.bf16.msra.mxu0 %v459
    %521 = vmatpush.bf16.msra.mxu0 %v457
    %522 = vmatpush.bf16.msra.mxu0 %v455
    %523 = vmatpush.bf16.msra.mxu0 %v453
    %524 = vmatpush.bf16.msra.mxu0 %v451
    %525 = vmatpush.bf16.msra.mxu0 %v449
    %526 = vmatmul.bf16.gmra.mxu0 %v318
    %v527 = vpop.f32.mrf.mxu0
    %v528 = vadd.f32 %v514, %v527
    %v529 = vpop.f32.mrf.mxu0
    %530 = vdwg.mxu0
    %531 = vmatpush.bf16.msra.mxu0 %v479
    %532 = vmatpush.bf16.msra.mxu0 %v477
    %533 = vmatpush.bf16.msra.mxu0 %v475
    %534 = vmatpush.bf16.msra.mxu0 %v473
    %535 = vmatpush.bf16.msra.mxu0 %v471
    %536 = vmatpush.bf16.msra.mxu0 %v469
    %537 = vmatpush.bf16.msra.mxu0 %v467
    %538 = vmatpush.bf16.msra.mxu0 %v465
    %539 = vmatmul.bf16.gmra.mxu0 %v319
    %v540 = vpop.f32.mrf.mxu0
    %v541 = vadd.f32 %v528, %v540
    %v542 = vpop.f32.mrf.mxu0
    %543 = vdwg.mxu0
    %544 = vmatpush.bf16.msra.mxu0 %v464
    %545 = vmatpush.bf16.msra.mxu0 %v462
    %546 = vmatpush.bf16.msra.mxu0 %v460
    %547 = vmatpush.bf16.msra.mxu0 %v458
    %548 = vmatpush.bf16.msra.mxu0 %v456
    %549 = vmatpush.bf16.msra.mxu0 %v454
    %550 = vmatpush.bf16.msra.mxu0 %v452
    %551 = vmatpush.bf16.msra.mxu0 %v450
    %552 = vmatmul.bf16.gmra.mxu0 %v318
    %v553 = vpop.f32.mrf.mxu0
    %v554 = vadd.f32 %v515, %v553
    %v555 = vpop.f32.mrf.mxu0
    %556 = vdwg.mxu0
    %557 = vmatpush.bf16.msra.mxu0 %v480
    %558 = vmatpush.bf16.msra.mxu0 %v478
    %559 = vmatpush.bf16.msra.mxu0 %v476
    %560 = vmatpush.bf16.msra.mxu0 %v474
    %561 = vmatpush.bf16.msra.mxu0 %v472
    %562 = vmatpush.bf16.msra.mxu0 %v470
    %563 = vmatpush.bf16.msra.mxu0 %v468
    %564 = vmatpush.bf16.msra.mxu0 %v466
    %565 = vmatmul.bf16.gmra.mxu0 %v319
    %v566 = vpop.f32.mrf.mxu0
    %v567 = vadd.f32 %v554, %v566
    %v568 = vpop.f32.mrf.mxu0
    %569 = vdwg.mxu0
    %v570 = vmax.f32 %v541, 0.0
    %v571 = vmax.f32 %v567, 0.0
    %v572 = vpack.c.bf16 %v570, %v570
    %v573 = vpack.c.bf16 %v571, %v571
    %v574 = vld [vmem:[%s5] sm:$0xf]
    %v575 = vld [vmem:[%s5 + $0x4] sm:$0xf]
    %v576 = vld [vmem:[%s5 + $0x8] sm:$0xf]
    %v577 = vld [vmem:[%s5 + $0xc] sm:$0xf]
    %v578 = vld [vmem:[%s5 + $0x10] sm:$0xf]
    %v579 = vld [vmem:[%s5 + $0x14] sm:$0xf]
    %v580 = vld [vmem:[%s5 + $0x18] sm:$0xf]
    %v581 = vld [vmem:[%s5 + $0x1c] sm:$0xf]
    %v582 = vld [vmem:[%s5 + $0x20] sm:$0xf]
    %v583 = vld [vmem:[%s5 + $0x24] sm:$0xf]
    %v584 = vld [vmem:[%s5 + $0x28] sm:$0xf]
    %v585 = vld [vmem:[%s5 + $0x2c] sm:$0xf]
    %v586 = vld [vmem:[%s5 + $0x30] sm:$0xf]
    %v587 = vld [vmem:[%s5 + $0x34] sm:$0xf]
    %v588 = vld [vmem:[%s5 + $0x38] sm:$0xf]
    %v589 = vld [vmem:[%s5 + $0x3c] sm:$0xf]
    %v590 = vld [vmem:[%s5 + $0x40] sm:$0xf]
    %v591 = vld [vmem:[%s5 + $0x44] sm:$0xf]
    %v592 = vld [vmem:[%s5 + $0x48] sm:$0xf]
    %v593 = vld [vmem:[%s5 + $0x4c] sm:$0xf]
    %v594 = vld [vmem:[%s5 + $0x50] sm:$0xf]
    %v595 = vld [vmem:[%s5 + $0x54] sm:$0xf]
    %v596 = vld [vmem:[%s5 + $0x58] sm:$0xf]
    %v597 = vld [vmem:[%s5 + $0x5c] sm:$0xf]
    %v598 = vld [vmem:[%s5 + $0x60] sm:$0xf]
    %v599 = vld [vmem:[%s5 + $0x64] sm:$0xf]
    %v600 = vld [vmem:[%s5 + $0x68] sm:$0xf]
    %v601 = vld [vmem:[%s5 + $0x6c] sm:$0xf]
    %v602 = vld [vmem:[%s5 + $0x70] sm:$0xf]
    %v603 = vld [vmem:[%s5 + $0x74] sm:$0xf]
    %v604 = vld [vmem:[%s5 + $0x78] sm:$0xf]
    %v605 = vld [vmem:[%s5 + $0x7c] sm:$0xf]
    %v606 = vld [vmem:[%s6] sm:$0x1]
    %v639 = vunpack.c.l.b16 %v574
    %v640 = vunpack.c.l.b16 %v575
    %v641 = vunpack.c.l.b16 %v576
    %v642 = vunpack.c.l.b16 %v577
    %v643 = vunpack.c.l.b16 %v578
    %v644 = vunpack.c.l.b16 %v579
    %v645 = vunpack.c.l.b16 %v580
    %v646 = vunpack.c.l.b16 %v581
    %v647 = vunpack.c.l.b16 %v582
    %v648 = vunpack.c.l.b16 %v583
    %v649 = vunpack.c.l.b16 %v584
    %v650 = vunpack.c.l.b16 %v585
    %v651 = vunpack.c.l.b16 %v586
    %v652 = vunpack.c.l.b16 %v587
    %v653 = vunpack.c.l.b16 %v588
    %v654 = vunpack.c.l.b16 %v589
    %v655 = vunpack.c.l.b16 %v590
    %v656 = vunpack.c.l.b16 %v591
    %v657 = vunpack.c.l.b16 %v592
    %v658 = vunpack.c.l.b16 %v593
    %v659 = vunpack.c.l.b16 %v594
    %v660 = vunpack.c.l.b16 %v595
    %v661 = vunpack.c.l.b16 %v596
    %v662 = vunpack.c.l.b16 %v597
    %v663 = vunpack.c.l.b16 %v598
    %v664 = vunpack.c.l.b16 %v599
    %v665 = vunpack.c.l.b16 %v600
    %v666 = vunpack.c.l.b16 %v601
    %v667 = vunpack.c.l.b16 %v602
    %v668 = vunpack.c.l.b16 %v603
    %v669 = vunpack.c.l.b16 %v604
    %v670 = vunpack.c.l.b16 %v605
    %v671 = vpack.c.b16 %v640, %v639
    %v672 = vpack.c.b16 %v642, %v641
    %v673 = vpack.c.b16 %v644, %v643
    %v674 = vpack.c.b16 %v646, %v645
    %v675 = vpack.c.b16 %v648, %v647
    %v676 = vpack.c.b16 %v650, %v649
    %v677 = vpack.c.b16 %v652, %v651
    %v678 = vpack.c.b16 %v654, %v653
    %v679 = vpack.c.b16 %v656, %v655
    %v680 = vpack.c.b16 %v658, %v657
    %v681 = vpack.c.b16 %v660, %v659
    %v682 = vpack.c.b16 %v662, %v661
    %v683 = vpack.c.b16 %v664, %v663
    %v684 = vpack.c.b16 %v666, %v665
    %v685 = vpack.c.b16 %v668, %v667
    %v686 = vpack.c.b16 %v670, %v669
    %703 = vmatpush.bf16.msra.mxu0 %v678
    %704 = vmatpush.bf16.msra.mxu0 %v677
    %705 = vmatpush.bf16.msra.mxu0 %v676
    %706 = vmatpush.bf16.msra.mxu0 %v675
    %707 = vmatpush.bf16.msra.mxu0 %v674
    %708 = vmatpush.bf16.msra.mxu0 %v673
    %709 = vmatpush.bf16.msra.mxu0 %v672
    %710 = vmatpush.bf16.msra.mxu0 %v671
    %711 = vmatmul.bf16.gmra.mxu0 %v572
    %v712 = vpop.f32.mrf.mxu0
    %v713 = vadd.f32 %v606, %v712
    %v714 = vpop.f32.mrf.mxu0
    %715 = vdwg.mxu0
    %716 = vmatpush.bf16.msra.mxu0 %v686
    %717 = vmatpush.bf16.msra.mxu0 %v685
    %718 = vmatpush.bf16.msra.mxu0 %v684
    %719 = vmatpush.bf16.msra.mxu0 %v683
    %720 = vmatpush.bf16.msra.mxu0 %v682
    %721 = vmatpush.bf16.msra.mxu0 %v681
    %722 = vmatpush.bf16.msra.mxu0 %v680
    %723 = vmatpush.bf16.msra.mxu0 %v679
    %724 = vmatmul.bf16.gmra.mxu0 %v573
    %v725 = vpop.f32.mrf.mxu0
    %v726 = vadd.f32 %v713, %v725
    %v727 = vpop.f32.mrf.mxu0
    %728 = vdwg.mxu0
    %v729 = vtanh.pop %v726
    %v730 = vmul.f32 %v729, 3.5
    %v731 = vadd.f32 %v730, -1.5
    %v732 = vmul.f32 %v731, 1.442695
    %v733 = vpow.pop %v732
    %v734 = vlaneseq
    %v735 = vand.u32 %v734, 127
    %v736 = vand.u32 %v735, 7
    %vm737 = vcmp.lt.s32.totalorder %v736, 4
    %v738 = vsel %vm737, %v726, %v733
    %vm739 = vcmask 516096
    %740 = vst.msk [vmem:[%s7] sm:$0x1] %vm739, %v738
    // Predicated region
    $region38: #{residual_actor_forward.1} parent=1 // pred_check
      _
    $region39: #{residual_actor_forward.1} parent=1 // pred_check_branch
      %742 = sbr.rel (0) target = $region41
    $region40: #{residual_actor_forward.1} parent=1 // pred_region
      _
    $region41: #{residual_actor_forward.1} parent=1 // pred_fallthru
      _
    // Predicated region
    $region42: #{residual_actor_forward.1} parent=1 // pred_check
      _
    $region43: #{residual_actor_forward.1} parent=1 // pred_check_branch
      %744 = sbr.rel (0) target = $region45
    $region44: #{residual_actor_forward.1} parent=1 // pred_region
      _
    $region45: #{residual_actor_forward.1} parent=1 // pred_fallthru
      _
    %745 = vsyncpa [#allocation3], 1
    %746 = vsyncpa [#allocation5], 1

</llo_original>
